<compile_context>
chip_gen: v7x
topology: tpu7x:2x2x1
jax: 0.10.0
libtpu: 0.0.40
codegen_flags: <defaults>
</compile_context>

<pallas_src>
import jax
import jax.numpy as jnp
from jax import lax
from jax.experimental import pallas as pl
from jax.experimental.pallas import tpu as pltpu


def _round_up(x, m):
    return (x + m - 1) // m * m


# --------------------------------------------------------------------------------------
# Kernel: one batch block.  conv(+BN1)+ReLU per t-block, FC1(+BN2) accumulated over
# t-blocks, ReLU, final FC.  Three MXU matmul stages; all weights VMEM-resident.
# --------------------------------------------------------------------------------------
def _classifier_kernel(x_ref, w1_ref, b1_ref, w2_ref, b2_ref, w3_ref, b3_ref, o_ref):
    # x_ref : (n_tblk, TB, Wwin_pad)   channel-interleaved input windows
    # w1_ref: (Wwin_pad, C*Tt)         banded conv (+BN1) weight, shared by all t-blocks
    # w2_ref: (n_tblk, C*Tt, F2)       FC1 (+BN2) weight, permuted & split per t-block
    n_tblk, tb_rows, _ = x_ref.shape
    f2 = w2_ref.shape[2]
    cdt = w2_ref.dtype

    def step(tb, acc):
        xwin = x_ref[tb]                                               # (TB, Wwin_pad)
        f = jnp.dot(xwin, w1_ref[...], preferred_element_type=jnp.float32)
        f = jnp.maximum(f + b1_ref[...], 0.0).astype(cdt)              # (TB, C*Tt)
        return acc + jnp.dot(f, w2_ref[tb], preferred_element_type=jnp.float32)

    acc = jnp.zeros((tb_rows, f2), jnp.float32)
    if n_tblk <= 8:
        for tb in range(n_tblk):          # fully unrolled: LLO scheduler visibility
            acc = step(tb, acc)
    else:
        acc = lax.fori_loop(0, n_tblk, step, acc)

    h = jnp.maximum(acc + b2_ref[...], 0.0).astype(cdt)                # (TB, F2)
    o = jnp.dot(h, w3_ref[...], preferred_element_type=jnp.float32) + b3_ref[...]
    o_ref[...] = o.astype(o_ref.dtype)


# --------------------------------------------------------------------------------------
# Parameter folding (run ONCE per parameter set; cache the result across forward calls).
# --------------------------------------------------------------------------------------
def fold_params(params, *, kernel=8, stride=4, pad=3, eps=1e-5,
                compute_dtype=jnp.bfloat16):
    f32 = jnp.float32
    K, S, P = kernel, stride, pad
    ni = params["w_dw"].shape[0]
    C = params["w_pw"].shape[0]
    F2, F1 = params["w_fc1"].shape
    no = params["w_fc2"].shape[0]
    assert F1 % C == 0
    l_out = F1 // C

    # t-block width: Tt conv outputs share one input window; C*Tt lanes (C=32 -> 128).
    Tt = max(1, min(-(-128 // C), l_out))
    l_out_pad = _round_up(l_out, Tt)
    n_tblk = l_out_pad // Tt
    Wpos = Tt * S + K - S                    # input positions per (overlapping) window
    Wwin = Wpos * ni
    Wwin_pad = _round_up(Wwin, 128)
    CT = C * Tt
    no_pad = _round_up(no, 128)

    wdw = params["w_dw"].reshape(ni, K).astype(f32)
    wpw = params["w_pw"].reshape(C, ni).astype(f32)
    bdw = params["b_dw"].astype(f32)
    bpw = params["b_pw"].astype(f32)

    # Fold BatchNorm1d(C) (eval / running stats) into the conv.
    s1 = params["bn1_g"].astype(f32) / jnp.sqrt(params["bn1_v"].astype(f32) + eps)
    t1 = params["bn1_b"].astype(f32) - s1 * params["bn1_m"].astype(f32)

    # Per-tap fused weight wtap[i, k, c] = s1[c] * wpw[c, i] * wdw[i, k].
    wtap = s1[None, None, :] * wpw.T[:, None, :] * wdw[:, :, None]       # (ni, K, C)
    bconv = s1 * (wpw @ bdw + bpw) + t1                                  # (C,)

    # Banded weight for Tt consecutive outputs sharing one window of Wpos positions:
    #   W1[(p*ni + i), (tau*C + c)] = wtap[i, p - tau*S, c]   (0 if tap out of range)
    p_idx = jnp.arange(Wpos)
    tau_idx = jnp.arange(Tt)
    k_rel = p_idx[:, None] - tau_idx[None, :] * S                        # (Wpos, Tt)
    valid = (k_rel >= 0) & (k_rel < K)
    band = jnp.where(valid[None, :, :, None],
                     wtap[:, jnp.clip(k_rel, 0, K - 1), :], 0.0)         # (ni,Wpos,Tt,C)
    w1 = band.transpose(1, 0, 2, 3).reshape(Wwin, CT)                    # rows: p*ni+i
    w1 = jnp.zeros((Wwin_pad, CT), f32).at[:Wwin].set(w1)
    b1 = jnp.tile(bconv, Tt).reshape(1, CT)                              # cols: tau*C+c

    # Fold BatchNorm1d(F2) into FC1; permute FC1 rows from the PyTorch flatten order
    # (c*l_out + t) to the kernel's t-block-major order (t*C + c) and split per t-block
    # so FC1 can be accumulated over the conv blocks.  Padded t positions get zero rows.
    s2 = params["bn2_g"].astype(f32) / jnp.sqrt(params["bn2_v"].astype(f32) + eps)
    t2 = params["bn2_b"].astype(f32) - s2 * params["bn2_m"].astype(f32)
    wf = params["w_fc1"].astype(f32).reshape(F2, C, l_out) * s2[:, None, None]
    wf = jnp.pad(wf, ((0, 0), (0, 0), (0, l_out_pad - l_out)))
    w2 = wf.transpose(2, 1, 0).reshape(n_tblk, CT, F2)
    b2 = (s2 * params["b_fc1"].astype(f32) + t2).reshape(1, F2)

    # Final Linear, lane-padded to a multiple of 128 (unmasked output store).
    w3 = jnp.zeros((F2, no_pad), f32).at[:, :no].set(params["w_fc2"].astype(f32).T)
    b3 = jnp.zeros((1, no_pad), f32).at[0, :no].set(params["b_fc2"].astype(f32))

    cdt = jnp.dtype(compute_dtype)
    folded = dict(w1=w1.astype(cdt), b1=b1, w2=w2.astype(cdt), b2=b2,
                  w3=w3.astype(cdt), b3=b3)
    cfg = dict(ni=ni, K=K, S=S, P=P, C=C, Tt=Tt, l_out=l_out, l_out_pad=l_out_pad,
               n_tblk=n_tblk, Wpos=Wpos, Wwin=Wwin, Wwin_pad=Wwin_pad, CT=CT,
               F2=F2, no=no, no_pad=no_pad, compute_dtype=cdt)
    return folded, cfg


def _pick_batch_block(n):
    # Small batch: one grid step (weights streamed once, no per-step pipeline overhead,
    # no duplicated weight DMA across TensorCores).  Large batch: 256-row blocks
    # (multiple of the 256-wide v6e/v7x MXU and of 128 for v5e) sharded in parallel.
    if n <= 256:
        return _round_up(max(n, 1), 8)
    return 256


# --------------------------------------------------------------------------------------
# Forward pass (per-call): window the input and launch the fused kernel.
# --------------------------------------------------------------------------------------
def classifier_forward(x, folded, cfg):
    N, ni, L = x.shape
    K, S, P = cfg["K"], cfg["S"], cfg["P"]
    assert ni == cfg["ni"]
    assert (L + 2 * P - K) // S + 1 == cfg["l_out"], "raw_size inconsistent with FC1"

    Tt, n_tblk = cfg["Tt"], cfg["n_tblk"]
    Wpos, Wwin, Wwin_pad = cfg["Wpos"], cfg["Wwin"], cfg["Wwin_pad"]
    CT, F2 = cfg["CT"], cfg["F2"]
    no, no_pad = cfg["no"], cfg["no_pad"]
    cdt = cfg["compute_dtype"]

    # Input windowing (cheap, ~K/S duplication): each t-block of Tt conv outputs reads
    # one contiguous, channel-interleaved window of Wpos padded positions.
    Lp = cfg["l_out_pad"] * S + (K - S)
    right = max(0, Lp - P - L)
    xp = jnp.pad(x.astype(cdt), ((0, 0), (0, 0), (P, right)))            # (N, ni, Lp')
    xt = xp.transpose(0, 2, 1)                                           # (N, Lp', ni)
    pos = (jnp.arange(n_tblk) * Tt * S)[:, None] + jnp.arange(Wpos)[None, :]
    xb = xt[:, pos, :].reshape(N, n_tblk, Wwin)                          # (N, nt, Wwin)

    TB = _pick_batch_block(N)
    Npad = _round_up(N, TB)
    xb = jnp.pad(xb, ((0, Npad - N), (0, 0), (0, Wwin_pad - Wwin)))
    xb = xb.transpose(1, 0, 2)                                           # (nt, Npad, Wwin_pad)

    num_blocks = Npad // TB
    w1, b1, w2, b2, w3, b3 = (folded["w1"], folded["b1"], folded["w2"],
                              folded["b2"], folded["w3"], folded["b3"])

    # VMEM budget from the actual buffers (+ headroom).
    itemsize = jnp.dtype(cdt).itemsize
    weight_bytes = ((w1.size + w2.size + w3.size) * itemsize
                    + (b1.size + b2.size + b3.size) * 4)
    block_bytes = (2 * TB * n_tblk * Wwin_pad * itemsize     # x block (double-buffered)
                   + 2 * TB * no_pad * 4                     # out block (double-buffered)
                   + TB * (F2 + CT) * 8)                     # accumulator / temporaries
    vmem_limit = int(1.25 * (weight_bytes + block_bytes)) + (2 << 20)
    vmem_limit = min(max(vmem_limit, 16 << 20), 127 << 20)

    out = pl.pallas_call(
        _classifier_kernel,
        out_shape=jax.ShapeDtypeStruct((Npad, no_pad), jnp.float32),
        grid=(num_blocks,),
        in_specs=[
            pl.BlockSpec((n_tblk, TB, Wwin_pad), lambda n: (0, n, 0)),
            # Weights / biases: whole-array, single-buffered VMEM residents.
            pl.BlockSpec(memory_space=pltpu.MemorySpace.VMEM),
            pl.BlockSpec(memory_space=pltpu.MemorySpace.VMEM),
            pl.BlockSpec(memory_space=pltpu.MemorySpace.VMEM),
            pl.BlockSpec(memory_space=pltpu.MemorySpace.VMEM),
            pl.BlockSpec(memory_space=pltpu.MemorySpace.VMEM),
            pl.BlockSpec(memory_space=pltpu.MemorySpace.VMEM),
        ],
        out_specs=pl.BlockSpec((TB, no_pad), lambda n: (n, 0)),
        compiler_params=pltpu.CompilerParams(
            dimension_semantics=(("parallel",) if num_blocks > 1 else ("arbitrary",)),
            vmem_limit_bytes=vmem_limit),
    )(xb, w1, b1, w2, b2, w3, b3)

    return out[:N, :no]


def classifier_1d_1_conv_1fc(x, params, *, kernel=8, stride=4, pad=3, eps=1e-5,
                             compute_dtype=jnp.bfloat16):
    """Convenience wrapper (folds + runs).  Cache fold_params() output across calls."""
    folded, cfg = fold_params(params, kernel=kernel, stride=stride, pad=pad, eps=eps,
                              compute_dtype=compute_dtype)
    return classifier_forward(x, folded, cfg)


# --------------------------------------------------------------------------------------
# Pure-JAX reference mirroring the PyTorch eval-mode forward.
# --------------------------------------------------------------------------------------
def _ref_forward(x, params, *, kernel=8, stride=4, pad=3, eps=1e-5):
    N, ni, L = x.shape
    x4 = x[:, :, None, :]
    dw = lax.conv_general_dilated(
        x4, params["w_dw"], window_strides=(1, stride),
        padding=((0, 0), (pad, pad)),
        dimension_numbers=("NCHW", "OIHW", "NCHW"),
        feature_group_count=ni,
    ) + params["b_dw"].reshape(1, -1, 1, 1)
    pw = lax.conv_general_dilated(
        dw, params["w_pw"], window_strides=(1, 1),
        padding=((0, 0), (0, 0)),
        dimension_numbers=("NCHW", "OIHW", "NCHW"),
    ) + params["b_pw"].reshape(1, -1, 1, 1)
    y = pw[:, :, 0, :]                                    # .squeeze() of the height axis
    s1 = params["bn1_g"] / jnp.sqrt(params["bn1_v"] + eps)
    y = s1.reshape(1, -1, 1) * (y - params["bn1_m"].reshape(1, -1, 1)) \
        + params["bn1_b"].reshape(1, -1, 1)
    y = jnp.maximum(y, 0.0)                               # Dropout is identity in eval
    f = y.reshape(N, -1)
    z = f @ params["w_fc1"].T + params["b_fc1"]
    s2 = params["bn2_g"] / jnp.sqrt(params["bn2_v"] + eps)
    z = s2 * (z - params["bn2_m"]) + params["bn2_b"]
    z = jnp.maximum(z, 0.0)
    return z @ params["w_fc2"].T + params["b_fc2"]


if __name__ == "__main__":
    # Small shapes consistent with the module: raw input (N, raw_ni, raw_size).
    N, raw_ni, raw_size, n_classes = 2, 4, 16, 8
    K, S, P, C, F2 = 8, 4, 3, 32, 128
    l_out = (raw_size + 2 * P - K) // S + 1               # = raw_size // 4 = 4
    flat_in = C * l_out                                    # = 128

    key = jax.random.PRNGKey(0)
    keys = jax.random.split(key, 16)
    x = jax.random.normal(keys[0], (N, raw_ni, raw_size), dtype=jnp.float32)

    # Deterministic synthetic parameters in PyTorch layouts.
    params = dict(
        w_dw=jax.random.normal(keys[1], (raw_ni, 1, 1, K), jnp.float32) * 0.3,
        b_dw=jax.random.normal(keys[2], (raw_ni,), jnp.float32) * 0.1,
        w_pw=jax.random.normal(keys[3], (C, raw_ni, 1, 1), jnp.float32) * 0.3,
        b_pw=jax.random.normal(keys[4], (C,), jnp.float32) * 0.1,
        bn1_g=jax.random.uniform(keys[5], (C,), jnp.float32, 0.5, 1.5),
        bn1_b=jax.random.normal(keys[6], (C,), jnp.float32) * 0.1,
        bn1_m=jax.random.normal(keys[7], (C,), jnp.float32) * 0.1,
        bn1_v=jax.random.uniform(keys[8], (C,), jnp.float32, 0.5, 1.5),
        w_fc1=jax.random.normal(keys[9], (F2, flat_in), jnp.float32) * 0.1,
        b_fc1=jax.random.normal(keys[10], (F2,), jnp.float32) * 0.1,
        bn2_g=jax.random.uniform(keys[11], (F2,), jnp.float32, 0.5, 1.5),
        bn2_b=jax.random.normal(keys[12], (F2,), jnp.float32) * 0.1,
        bn2_m=jax.random.normal(keys[13], (F2,), jnp.float32) * 0.1,
        bn2_v=jax.random.uniform(keys[14], (F2,), jnp.float32, 0.5, 1.5),
        w_fc2=jax.random.normal(keys[15], (n_classes, F2), jnp.float32) * 0.1,
        b_fc2=jnp.zeros((n_classes,), jnp.float32),
    )

    ref = _ref_forward(x, params, kernel=K, stride=S, pad=P)

    # Float32 compute path: tight validation of the folding / kernel math.
    folded32, cfg32 = fold_params(params, kernel=K, stride=S, pad=P,
                                  compute_dtype=jnp.float32)
    out32 = jax.block_until_ready(classifier_forward(x, folded32, cfg32))
    assert out32.shape == (N, n_classes), out32.shape
    err32 = float(jnp.max(jnp.abs(out32 - ref)))
    assert jnp.allclose(out32, ref, atol=2e-3, rtol=2e-3), err32

    # bfloat16 weights/activations with float32 accumulation (MXU-native perf path).
    folded16, cfg16 = fold_params(params, kernel=K, stride=S, pad=P,
                                  compute_dtype=jnp.bfloat16)
    out16 = jax.block_until_ready(classifier_forward(x, folded16, cfg16))
    err16 = float(jnp.max(jnp.abs(out16 - ref)))
    assert jnp.allclose(out16, ref, atol=5e-2, rtol=5e-2), err16

    # TODO(synk): Dropout is an inference no-op and BatchNorm uses running stats
    # (eval mode); training-mode batch statistics are not computed in-kernel.
    print("KERNEL_OK")
</pallas_src>

<mosaic_0001>
module attributes {stable_mosaic.version = 11 : i64} {
  func.func @_classifier_kernel(%arg0: i32, %arg1: memref<1x8x128xf32, #tpu.memory_space<vmem>>, %arg2: memref<128x128xf32, #tpu.memory_space<vmem>>, %arg3: memref<1x128xf32, #tpu.memory_space<vmem>>, %arg4: memref<1x128x128xf32, #tpu.memory_space<vmem>>, %arg5: memref<1x128xf32, #tpu.memory_space<vmem>>, %arg6: memref<128x128xf32, #tpu.memory_space<vmem>>, %arg7: memref<1x128xf32, #tpu.memory_space<vmem>>, %arg8: memref<8x128xf32, #tpu.memory_space<vmem>>) attributes {dimension_semantics = [#tpu.dimension_semantics<arbitrary>], iteration_bounds = array<i64: 1>, scalar_prefetch = 0 : i64, scratch_operands = 0 : i64, tpu.core_type = #tpu.core_type<tc>, window_params = [{transform_indices = @transform_0, window_bounds = array<i64: 1, 8, 128>}, {pipeline_mode = #tpu.pipeline_mode<synchronous>, transform_indices = @transform_1, window_bounds = array<i64: 128, 128>}, {pipeline_mode = #tpu.pipeline_mode<synchronous>, transform_indices = @transform_2, window_bounds = array<i64: 1, 128>}, {pipeline_mode = #tpu.pipeline_mode<synchronous>, transform_indices = @transform_3, window_bounds = array<i64: 1, 128, 128>}, {pipeline_mode = #tpu.pipeline_mode<synchronous>, transform_indices = @transform_4, window_bounds = array<i64: 1, 128>}, {pipeline_mode = #tpu.pipeline_mode<synchronous>, transform_indices = @transform_5, window_bounds = array<i64: 128, 128>}, {pipeline_mode = #tpu.pipeline_mode<synchronous>, transform_indices = @transform_6, window_bounds = array<i64: 1, 128>}, {transform_indices = @transform_7, window_bounds = array<i64: 8, 128>}]} {
    %cst = arith.constant 0.000000e+00 : f32
    %0 = vector.broadcast %cst : f32 to vector<8x128xf32>
    %c0 = arith.constant 0 : index
    %c0_0 = arith.constant 0 : index
    %c0_1 = arith.constant 0 : index
    %1 = vector.load %arg1[%c0, %c0_0, %c0_1] : memref<1x8x128xf32, #tpu.memory_space<vmem>>, vector<1x8x128xf32>
    %2 = vector.shape_cast %1 : vector<1x8x128xf32> to vector<8x128xf32>
    %c0_2 = arith.constant 0 : index
    %c0_3 = arith.constant 0 : index
    %3 = vector.load %arg2[%c0_2, %c0_3] : memref<128x128xf32, #tpu.memory_space<vmem>>, vector<128x128xf32>
    %cst_4 = arith.constant dense<0.000000e+00> : vector<8x128xf32>
    %4 = tpu.matmul %2, %3, %cst_4 {dimension_numbers = #tpu.dot_dimension_numbers<[1], [0], [0], [1], [0, 0, 1, 1], [], []>} : vector<8x128xf32>, vector<128x128xf32>, vector<8x128xf32> -> vector<8x128xf32>
    %c0_5 = arith.constant 0 : index
    %c0_6 = arith.constant 0 : index
    %5 = vector.load %arg3[%c0_5, %c0_6] : memref<1x128xf32, #tpu.memory_space<vmem>>, vector<1x128xf32>
    %6 = vector.broadcast %5 : vector<1x128xf32> to vector<8x128xf32>
    %7 = arith.addf %4, %6 : vector<8x128xf32>
    %cst_7 = arith.constant 0.000000e+00 : f32
    %8 = vector.broadcast %cst_7 : f32 to vector<8x128xf32>
    %9 = arith.maximumf %7, %8 : vector<8x128xf32>
    %c0_8 = arith.constant 0 : index
    %c0_9 = arith.constant 0 : index
    %c0_10 = arith.constant 0 : index
    %10 = vector.load %arg4[%c0_8, %c0_9, %c0_10] : memref<1x128x128xf32, #tpu.memory_space<vmem>>, vector<1x128x128xf32>
    %11 = vector.shape_cast %10 : vector<1x128x128xf32> to vector<128x128xf32>
    %cst_11 = arith.constant dense<0.000000e+00> : vector<8x128xf32>
    %12 = tpu.matmul %9, %11, %cst_11 {dimension_numbers = #tpu.dot_dimension_numbers<[1], [0], [0], [1], [0, 0, 1, 1], [], []>} : vector<8x128xf32>, vector<128x128xf32>, vector<8x128xf32> -> vector<8x128xf32>
    %13 = arith.addf %0, %12 : vector<8x128xf32>
    %c0_12 = arith.constant 0 : index
    %c0_13 = arith.constant 0 : index
    %14 = vector.load %arg5[%c0_12, %c0_13] : memref<1x128xf32, #tpu.memory_space<vmem>>, vector<1x128xf32>
    %15 = vector.broadcast %14 : vector<1x128xf32> to vector<8x128xf32>
    %16 = arith.addf %13, %15 : vector<8x128xf32>
    %cst_14 = arith.constant 0.000000e+00 : f32
    %17 = vector.broadcast %cst_14 : f32 to vector<8x128xf32>
    %18 = arith.maximumf %16, %17 : vector<8x128xf32>
    %c0_15 = arith.constant 0 : index
    %c0_16 = arith.constant 0 : index
    %19 = vector.load %arg6[%c0_15, %c0_16] : memref<128x128xf32, #tpu.memory_space<vmem>>, vector<128x128xf32>
    %cst_17 = arith.constant dense<0.000000e+00> : vector<8x128xf32>
    %20 = tpu.matmul %18, %19, %cst_17 {dimension_numbers = #tpu.dot_dimension_numbers<[1], [0], [0], [1], [0, 0, 1, 1], [], []>} : vector<8x128xf32>, vector<128x128xf32>, vector<8x128xf32> -> vector<8x128xf32>
    %c0_18 = arith.constant 0 : index
    %c0_19 = arith.constant 0 : index
    %21 = vector.load %arg7[%c0_18, %c0_19] : memref<1x128xf32, #tpu.memory_space<vmem>>, vector<1x128xf32>
    %22 = vector.broadcast %21 : vector<1x128xf32> to vector<8x128xf32>
    %23 = arith.addf %20, %22 : vector<8x128xf32>
    %c0_20 = arith.constant 0 : index
    %c0_21 = arith.constant 0 : index
    %24 = vector.load %arg8[%c0_20, %c0_21] : memref<8x128xf32, #tpu.memory_space<vmem>>, vector<8x128xf32>
    tpu.vector_store %arg8[%c0_20, %c0_21], %23 {strides = array<i32>} : memref<8x128xf32, #tpu.memory_space<vmem>>, vector<8x128xf32>,
    return
  }
  func.func @transform_0(%arg0: i32) -> (i32, i32, i32) {
    %c0_i32 = arith.constant 0 : i32
    %c0_i32_0 = arith.constant 0 : i32
    %c0_i32_1 = arith.constant 0 : i32
    return %c0_i32, %arg0, %c0_i32_0 : i32, i32, i32
  }
  func.func @transform_1(%arg0: i32) -> (i32, i32) {
    %c0_i32 = arith.constant 0 : i32
    %c0_i32_0 = arith.constant 0 : i32
    %c0_i32_1 = arith.constant 0 : i32
    return %c0_i32, %c0_i32_0 : i32, i32
  }
  func.func @transform_2(%arg0: i32) -> (i32, i32) {
    %c0_i32 = arith.constant 0 : i32
    %c0_i32_0 = arith.constant 0 : i32
    %c0_i32_1 = arith.constant 0 : i32
    return %c0_i32, %c0_i32_0 : i32, i32
  }
  func.func @transform_3(%arg0: i32) -> (i32, i32, i32) {
    %c0_i32 = arith.constant 0 : i32
    %c0_i32_0 = arith.constant 0 : i32
    %c0_i32_1 = arith.constant 0 : i32
    %c0_i32_2 = arith.constant 0 : i32
    return %c0_i32, %c0_i32_0, %c0_i32_1 : i32, i32, i32
  }
  func.func @transform_4(%arg0: i32) -> (i32, i32) {
    %c0_i32 = arith.constant 0 : i32
    %c0_i32_0 = arith.constant 0 : i32
    %c0_i32_1 = arith.constant 0 : i32
    return %c0_i32, %c0_i32_0 : i32, i32
  }
  func.func @transform_5(%arg0: i32) -> (i32, i32) {
    %c0_i32 = arith.constant 0 : i32
    %c0_i32_0 = arith.constant 0 : i32
    %c0_i32_1 = arith.constant 0 : i32
    return %c0_i32, %c0_i32_0 : i32, i32
  }
  func.func @transform_6(%arg0: i32) -> (i32, i32) {
    %c0_i32 = arith.constant 0 : i32
    %c0_i32_0 = arith.constant 0 : i32
    %c0_i32_1 = arith.constant 0 : i32
    return %c0_i32, %c0_i32_0 : i32, i32
  }
  func.func @transform_7(%arg0: i32) -> (i32, i32) {
    %c0_i32 = arith.constant 0 : i32
    %c0_i32_0 = arith.constant 0 : i32
    return %arg0, %c0_i32 : i32, i32
  }
}

</mosaic_0001>

<llo_original>
// kernel: tpu_custom_call.1
$region0: #{tpu_custom_call.1}
  #allocation0 [shape = 'u32[]', space=smem, size = 0x4, offset = 0x4, fixed_abs, tag = 'smem constant byte address 0x4 - core index']
  #allocation1 [shape = 'u32[144,128]{1,0:T(1,128)}', space=vmem, size = 0x12000, scoped, tag = 'internal scratch']
  %s0 = inlined_call_operand.hbm [shape: f32[1,8,128], index: 0, kind: input, shape index: {}]
  %s1 = inlined_call_operand.hbm [shape: f32[128,128], index: 1, kind: input, shape index: {}]
  %s2 = inlined_call_operand.vmem [shape: f32[1,128], index: 2, kind: input, shape index: {}]
  %s3 = inlined_call_operand.hbm [shape: f32[1,128,128], index: 3, kind: input, shape index: {}]
  %s4 = inlined_call_operand.vmem [shape: f32[1,128], index: 4, kind: input, shape index: {}]
  %s5 = inlined_call_operand.hbm [shape: f32[128,128], index: 5, kind: input, shape index: {}]
  %s6 = inlined_call_operand.vmem [shape: f32[1,128], index: 6, kind: input, shape index: {}]
  %s7 = inlined_call_operand.hbm [shape: f32[8,128], index: 7, kind: output, shape index: {}]
  %s8 = sld [smem:[#allocation0]]
  $region54: #{tpu_custom_call.1} parent=0
    _
  %s10 = ssub.s32 1, %s8
  %s11 = scalar_select 0, %s10, %s8
  $region1: #{tpu_custom_call.1} parent=0
    #allocation2 [shape = 'u8[4096]{0}', space=vmem, size = 0x1000, scoped, tag = 'input window, operand 0, single buffered']
    #allocation3 [shape = 's32[1]{0}', space=sflag, size = 0x4, scoped, tag = 'scoped memory for tpu_custom_call.1']
    #allocation4 [shape = 's32[1]{0}', space=sflag, size = 0x4, scoped, tag = 'scoped memory for tpu_custom_call.1']
    #allocation5 [shape = 'u8[65536]{0}', space=vmem, size = 0x10000, scoped, tag = 'input window, operand 1, single buffered']
    #allocation6 [shape = 's32[1]{0}', space=sflag, size = 0x4, scoped, tag = 'scoped memory for tpu_custom_call.1']
    #allocation7 [shape = 'u8[65536]{0}', space=vmem, size = 0x10000, scoped, tag = 'input window, operand 3, single buffered']
    #allocation8 [shape = 'u8[65536]{0}', space=vmem, size = 0x10000, scoped, tag = 'input window, operand 5, single buffered']
    #allocation9 [shape = 's32[1]{0}', space=sflag, size = 0x4, scoped, tag = 'scoped memory for tpu_custom_call.1']
    #allocation10 [shape = 'u8[4096]{0}', space=vmem, size = 0x1000, scoped, tag = 'output window, operand 0, single buffered']
    %12 = vsyncpa [#allocation3], 0
    %13 = vsyncpa [#allocation6], 0
    %14 = vsyncpa [#allocation9], 0
    %15 = vsyncpa [#allocation4], 0
    // Predicated region
    $region2: #{tpu_custom_call.1} parent=1 // pred_check
      _
    $region3: #{tpu_custom_call.1} parent=1 // pred_check_branch
      %17 = sbr.rel (0) target = $region5
    $region4: #{tpu_custom_call.1} parent=1 // pred_region
      %s19 = ssub.s32 128, 128
      %20 = vsyncadd [#allocation3], %s19
      %s22 = sshll.u32 [#allocation2], 4
      %s23 = int_to_ptr.vmem [resolvable:$true] %s22
      %25 = dma.hbm_to_vmem [thread:$0]  %s0, 128, %s23, [#allocation3]
    $region5: #{tpu_custom_call.1} parent=1 // pred_fallthru
      _
    // Predicated region
    $region6: #{tpu_custom_call.1} parent=1 // pred_check
      _
    $region7: #{tpu_custom_call.1} parent=1 // pred_check_branch
      %27 = sbr.rel (0) target = $region9
    $region8: #{tpu_custom_call.1} parent=1 // pred_region
      %s29 = ssub.s32 2048, 2048
      %30 = vsyncadd [#allocation6], %s29
      %s31 = sshll.u32 [#allocation5], 4
      %s32 = int_to_ptr.vmem [resolvable:$true] %s31
      %37 = dma.hbm_to_vmem [thread:$0]  %s1, 2048, %s32, [#allocation6], 128, 128, 8
    $region9: #{tpu_custom_call.1} parent=1 // pred_fallthru
      _
    // Predicated region
    $region10: #{tpu_custom_call.1} parent=1 // pred_check
      _
    $region11: #{tpu_custom_call.1} parent=1 // pred_check_branch
      %39 = sbr.rel (0) target = $region13
    $region12: #{tpu_custom_call.1} parent=1 // pred_region
      _
    $region13: #{tpu_custom_call.1} parent=1 // pred_fallthru
      _
    // Predicated region
    $region14: #{tpu_custom_call.1} parent=1 // pred_check
      _
    $region15: #{tpu_custom_call.1} parent=1 // pred_check_branch
      %41 = sbr.rel (0) target = $region17
    $region16: #{tpu_custom_call.1} parent=1 // pred_region
      %s43 = ssub.s32 2048, 2048
      %44 = vsyncadd [#allocation6], %s43
      %s45 = sshll.u32 [#allocation7], 4
      %s46 = int_to_ptr.vmem [resolvable:$true] %s45
      %51 = dma.hbm_to_vmem [thread:$0]  %s3, 2048, %s46, [#allocation6], 128, 128, 8
    $region17: #{tpu_custom_call.1} parent=1 // pred_fallthru
      _
    // Predicated region
    $region18: #{tpu_custom_call.1} parent=1 // pred_check
      _
    $region19: #{tpu_custom_call.1} parent=1 // pred_check_branch
      %53 = sbr.rel (0) target = $region21
    $region20: #{tpu_custom_call.1} parent=1 // pred_region
      _
    $region21: #{tpu_custom_call.1} parent=1 // pred_fallthru
      _
    // Predicated region
    $region22: #{tpu_custom_call.1} parent=1 // pred_check
      _
    $region23: #{tpu_custom_call.1} parent=1 // pred_check_branch
      %55 = sbr.rel (0) target = $region25
    $region24: #{tpu_custom_call.1} parent=1 // pred_region
      %s57 = ssub.s32 2048, 2048
      %58 = vsyncadd [#allocation9], %s57
      %s59 = sshll.u32 [#allocation8], 4
      %s60 = int_to_ptr.vmem [resolvable:$true] %s59
      %65 = dma.hbm_to_vmem [thread:$0]  %s5, 2048, %s60, [#allocation9], 128, 128, 8
    $region25: #{tpu_custom_call.1} parent=1 // pred_fallthru
      _
    // Predicated region
    $region26: #{tpu_custom_call.1} parent=1 // pred_check
      _
    $region27: #{tpu_custom_call.1} parent=1 // pred_check_branch
      %67 = sbr.rel (0) target = $region29
    $region28: #{tpu_custom_call.1} parent=1 // pred_region
      _
    $region29: #{tpu_custom_call.1} parent=1 // pred_fallthru
      _
    // Predicated region
    $region30: #{tpu_custom_call.1} parent=1 // pred_check
      _
    $region31: #{tpu_custom_call.1} parent=1 // pred_check_branch
      %69 = sbr.rel (0) target = $region33
    $region32: #{tpu_custom_call.1} parent=1 // pred_region
      %70 = dma.done [#allocation3], 128
    $region33: #{tpu_custom_call.1} parent=1 // pred_fallthru
      _
    // Predicated region
    $region34: #{tpu_custom_call.1} parent=1 // pred_check
      _
    $region35: #{tpu_custom_call.1} parent=1 // pred_check_branch
      %72 = sbr.rel (0) target = $region37
    $region36: #{tpu_custom_call.1} parent=1 // pred_region
      %73 = dma.done [#allocation6], 2048
    $region37: #{tpu_custom_call.1} parent=1 // pred_fallthru
      _
    // Predicated region
    $region38: #{tpu_custom_call.1} parent=1 // pred_check
      _
    $region39: #{tpu_custom_call.1} parent=1 // pred_check_branch
      %75 = sbr.rel (0) target = $region41
    $region40: #{tpu_custom_call.1} parent=1 // pred_region
      %76 = dma.done [#allocation6], 2048
    $region41: #{tpu_custom_call.1} parent=1 // pred_fallthru
      _
    // Predicated region
    $region42: #{tpu_custom_call.1} parent=1 // pred_check
      _
    $region43: #{tpu_custom_call.1} parent=1 // pred_check_branch
      %78 = sbr.rel (0) target = $region45
    $region44: #{tpu_custom_call.1} parent=1 // pred_region
      %79 = dma.done [#allocation9], 2048
    $region45: #{tpu_custom_call.1} parent=1 // pred_fallthru
      _
    %v80 = vld [vmem:[#allocation2] sm:$0xff]
    %v81 = vld [vmem:[#allocation5] sm:$0xff]
    %v82 = vld [vmem:[#allocation5 + $0x8] sm:$0xff]
    %v83 = vld [vmem:[#allocation5 + $0x10] sm:$0xff]
    %v84 = vld [vmem:[#allocation5 + $0x18] sm:$0xff]
    %v85 = vld [vmem:[#allocation5 + $0x20] sm:$0xff]
    %v86 = vld [vmem:[#allocation5 + $0x28] sm:$0xff]
    %v87 = vld [vmem:[#allocation5 + $0x30] sm:$0xff]
    %v88 = vld [vmem:[#allocation5 + $0x38] sm:$0xff]
    %v89 = vld [vmem:[#allocation5 + $0x40] sm:$0xff]
    %v90 = vld [vmem:[#allocation5 + $0x48] sm:$0xff]
    %v91 = vld [vmem:[#allocation5 + $0x50] sm:$0xff]
    %v92 = vld [vmem:[#allocation5 + $0x58] sm:$0xff]
    %v93 = vld [vmem:[#allocation5 + $0x60] sm:$0xff]
    %v94 = vld [vmem:[#allocation5 + $0x68] sm:$0xff]
    %v95 = vld [vmem:[#allocation5 + $0x70] sm:$0xff]
    %v96 = vld [vmem:[#allocation5 + $0x78] sm:$0xff]
    %v97 = vld [vmem:[%s2] sm:$0x1]
    %v99 = vlaneseq
    %v100 = vshrl.u32 %v99, 7
    %v101 = vsub.s32 0, %v100
    %v102 = vrot.slane %v97, %v101
    %104 = vmatprep.subr.mxu0 0.0
    %105 = vmatpush1.msra.mxu0 %v81
    %106 = vmatprep.subr.mxu0 0.0
    %107 = vmatpush1.msra.mxu0 %v82
    %108 = vmatprep.subr.mxu0 0.0
    %109 = vmatpush1.msra.mxu0 %v83
    %110 = vmatprep.subr.mxu0 0.0
    %111 = vmatpush1.msra.mxu0 %v84
    %112 = vmatprep.subr.mxu0 0.0
    %113 = vmatpush1.msra.mxu0 %v85
    %114 = vmatprep.subr.mxu0 0.0
    %115 = vmatpush1.msra.mxu0 %v86
    %116 = vmatprep.subr.mxu0 0.0
    %117 = vmatpush1.msra.mxu0 %v87
    %118 = vmatprep.subr.mxu0 0.0
    %119 = vmatpush1.msra.mxu0 %v88
    %120 = vmatprep.subr.mxu0 0.0
    %121 = vmatpush1.msra.mxu0 %v89
    %122 = vmatprep.subr.mxu0 0.0
    %123 = vmatpush1.msra.mxu0 %v90
    %124 = vmatprep.subr.mxu0 0.0
    %125 = vmatpush1.msra.mxu0 %v91
    %126 = vmatprep.subr.mxu0 0.0
    %127 = vmatpush1.msra.mxu0 %v92
    %128 = vmatprep.subr.mxu0 0.0
    %129 = vmatpush1.msra.mxu0 %v93
    %130 = vmatprep.subr.mxu0 0.0
    %131 = vmatpush1.msra.mxu0 %v94
    %132 = vmatprep.subr.mxu0 0.0
    %133 = vmatpush1.msra.mxu0 %v95
    %134 = vmatprep.subr.mxu0 0.0
    %135 = vmatpush1.msra.mxu0 %v96
    %136 = vmatprep.subr.mxu0 0.0
    %137 = vmatpush1.msra.mxu0 0.0
    %138 = vmatprep.subr.mxu0 0.0
    %139 = vmatpush1.msra.mxu0 0.0
    %140 = vmatprep.subr.mxu0 0.0
    %141 = vmatpush1.msra.mxu0 0.0
    %142 = vmatprep.subr.mxu0 0.0
    %143 = vmatpush1.msra.mxu0 0.0
    %144 = vmatprep.subr.mxu0 0.0
    %145 = vmatpush1.msra.mxu0 0.0
    %146 = vmatprep.subr.mxu0 0.0
    %147 = vmatpush1.msra.mxu0 0.0
    %148 = vmatprep.subr.mxu0 0.0
    %149 = vmatpush1.msra.mxu0 0.0
    %150 = vmatprep.subr.mxu0 0.0
    %151 = vmatpush1.msra.mxu0 0.0
    %152 = vmatprep.subr.mxu0 0.0
    %153 = vmatpush1.msra.mxu0 0.0
    %154 = vmatprep.subr.mxu0 0.0
    %155 = vmatpush1.msra.mxu0 0.0
    %156 = vmatprep.subr.mxu0 0.0
    %157 = vmatpush1.msra.mxu0 0.0
    %158 = vmatprep.subr.mxu0 0.0
    %159 = vmatpush1.msra.mxu0 0.0
    %160 = vmatprep.subr.mxu0 0.0
    %161 = vmatpush1.msra.mxu0 0.0
    %162 = vmatprep.subr.mxu0 0.0
    %163 = vmatpush1.msra.mxu0 0.0
    %164 = vmatprep.subr.mxu0 0.0
    %165 = vmatpush1.msra.mxu0 0.0
    %166 = vmatprep.subr.mxu0 0.0
    %167 = vmatpush1.msra.mxu0 0.0
    %168 = vmatprep.mubr.f32.mxu0 0.0
    %169 = vmatmul.mubr.f32.gmra.mrb[0].mxu0 %v80
    %v170 = vpop.f32.mrb[0].mxu0
    %v171 = vadd.f32 %v102, %v170
    %v172 = vpop.f32.mrb[0].mxu0
    %173 = vdwg.mxu0
    %v174 = vmax.f32 %v171, 0.0
    %v175 = vld [vmem:[#allocation7] sm:$0xff]
    %v176 = vld [vmem:[#allocation7 + $0x8] sm:$0xff]
    %v177 = vld [vmem:[#allocation7 + $0x10] sm:$0xff]
    %v178 = vld [vmem:[#allocation7 + $0x18] sm:$0xff]
    %v179 = vld [vmem:[#allocation7 + $0x20] sm:$0xff]
    %v180 = vld [vmem:[#allocation7 + $0x28] sm:$0xff]
    %v181 = vld [vmem:[#allocation7 + $0x30] sm:$0xff]
    %v182 = vld [vmem:[#allocation7 + $0x38] sm:$0xff]
    %v183 = vld [vmem:[#allocation7 + $0x40] sm:$0xff]
    %v184 = vld [vmem:[#allocation7 + $0x48] sm:$0xff]
    %v185 = vld [vmem:[#allocation7 + $0x50] sm:$0xff]
    %v186 = vld [vmem:[#allocation7 + $0x58] sm:$0xff]
    %v187 = vld [vmem:[#allocation7 + $0x60] sm:$0xff]
    %v188 = vld [vmem:[#allocation7 + $0x68] sm:$0xff]
    %v189 = vld [vmem:[#allocation7 + $0x70] sm:$0xff]
    %v190 = vld [vmem:[#allocation7 + $0x78] sm:$0xff]
    %v191 = vld [vmem:[%s4] sm:$0x1]
    %v193 = vlaneseq
    %v194 = vshrl.u32 %v193, 7
    %v195 = vsub.s32 0, %v194
    %v196 = vrot.slane %v191, %v195
    %198 = vmatprep.subr.mxu0 0.0
    %199 = vmatpush1.msra.mxu0 %v175
    %200 = vmatprep.subr.mxu0 0.0
    %201 = vmatpush1.msra.mxu0 %v176
    %202 = vmatprep.subr.mxu0 0.0
    %203 = vmatpush1.msra.mxu0 %v177
    %204 = vmatprep.subr.mxu0 0.0
    %205 = vmatpush1.msra.mxu0 %v178
    %206 = vmatprep.subr.mxu0 0.0
    %207 = vmatpush1.msra.mxu0 %v179
    %208 = vmatprep.subr.mxu0 0.0
    %209 = vmatpush1.msra.mxu0 %v180
    %210 = vmatprep.subr.mxu0 0.0
    %211 = vmatpush1.msra.mxu0 %v181
    %212 = vmatprep.subr.mxu0 0.0
    %213 = vmatpush1.msra.mxu0 %v182
    %214 = vmatprep.subr.mxu0 0.0
    %215 = vmatpush1.msra.mxu0 %v183
    %216 = vmatprep.subr.mxu0 0.0
    %217 = vmatpush1.msra.mxu0 %v184
    %218 = vmatprep.subr.mxu0 0.0
    %219 = vmatpush1.msra.mxu0 %v185
    %220 = vmatprep.subr.mxu0 0.0
    %221 = vmatpush1.msra.mxu0 %v186
    %222 = vmatprep.subr.mxu0 0.0
    %223 = vmatpush1.msra.mxu0 %v187
    %224 = vmatprep.subr.mxu0 0.0
    %225 = vmatpush1.msra.mxu0 %v188
    %226 = vmatprep.subr.mxu0 0.0
    %227 = vmatpush1.msra.mxu0 %v189
    %228 = vmatprep.subr.mxu0 0.0
    %229 = vmatpush1.msra.mxu0 %v190
    %230 = vmatprep.subr.mxu0 0.0
    %231 = vmatpush1.msra.mxu0 0.0
    %232 = vmatprep.subr.mxu0 0.0
    %233 = vmatpush1.msra.mxu0 0.0
    %234 = vmatprep.subr.mxu0 0.0
    %235 = vmatpush1.msra.mxu0 0.0
    %236 = vmatprep.subr.mxu0 0.0
    %237 = vmatpush1.msra.mxu0 0.0
    %238 = vmatprep.subr.mxu0 0.0
    %239 = vmatpush1.msra.mxu0 0.0
    %240 = vmatprep.subr.mxu0 0.0
    %241 = vmatpush1.msra.mxu0 0.0
    %242 = vmatprep.subr.mxu0 0.0
    %243 = vmatpush1.msra.mxu0 0.0
    %244 = vmatprep.subr.mxu0 0.0
    %245 = vmatpush1.msra.mxu0 0.0
    %246 = vmatprep.subr.mxu0 0.0
    %247 = vmatpush1.msra.mxu0 0.0
    %248 = vmatprep.subr.mxu0 0.0
    %249 = vmatpush1.msra.mxu0 0.0
    %250 = vmatprep.subr.mxu0 0.0
    %251 = vmatpush1.msra.mxu0 0.0
    %252 = vmatprep.subr.mxu0 0.0
    %253 = vmatpush1.msra.mxu0 0.0
    %254 = vmatprep.subr.mxu0 0.0
    %255 = vmatpush1.msra.mxu0 0.0
    %256 = vmatprep.subr.mxu0 0.0
    %257 = vmatpush1.msra.mxu0 0.0
    %258 = vmatprep.subr.mxu0 0.0
    %259 = vmatpush1.msra.mxu0 0.0
    %260 = vmatprep.subr.mxu0 0.0
    %261 = vmatpush1.msra.mxu0 0.0
    %262 = vmatprep.mubr.f32.mxu0 0.0
    %263 = vmatmul.mubr.f32.gmra.mrb[0].mxu0 %v174
    %v264 = vpop.f32.mrb[0].mxu0
    %v265 = vadd.f32 %v196, %v264
    %v266 = vpop.f32.mrb[0].mxu0
    %267 = vdwg.mxu0
    %v268 = vmax.f32 %v265, 0.0
    %v269 = vld [vmem:[#allocation8] sm:$0xff]
    %v270 = vld [vmem:[#allocation8 + $0x8] sm:$0xff]
    %v271 = vld [vmem:[#allocation8 + $0x10] sm:$0xff]
    %v272 = vld [vmem:[#allocation8 + $0x18] sm:$0xff]
    %v273 = vld [vmem:[#allocation8 + $0x20] sm:$0xff]
    %v274 = vld [vmem:[#allocation8 + $0x28] sm:$0xff]
    %v275 = vld [vmem:[#allocation8 + $0x30] sm:$0xff]
    %v276 = vld [vmem:[#allocation8 + $0x38] sm:$0xff]
    %v277 = vld [vmem:[#allocation8 + $0x40] sm:$0xff]
    %v278 = vld [vmem:[#allocation8 + $0x48] sm:$0xff]
    %v279 = vld [vmem:[#allocation8 + $0x50] sm:$0xff]
    %v280 = vld [vmem:[#allocation8 + $0x58] sm:$0xff]
    %v281 = vld [vmem:[#allocation8 + $0x60] sm:$0xff]
    %v282 = vld [vmem:[#allocation8 + $0x68] sm:$0xff]
    %v283 = vld [vmem:[#allocation8 + $0x70] sm:$0xff]
    %v284 = vld [vmem:[#allocation8 + $0x78] sm:$0xff]
    %v285 = vld [vmem:[%s6] sm:$0x1]
    %v287 = vlaneseq
    %v288 = vshrl.u32 %v287, 7
    %v289 = vsub.s32 0, %v288
    %v290 = vrot.slane %v285, %v289
    %292 = vmatprep.subr.mxu0 0.0
    %293 = vmatpush1.msra.mxu0 %v269
    %294 = vmatprep.subr.mxu0 0.0
    %295 = vmatpush1.msra.mxu0 %v270
    %296 = vmatprep.subr.mxu0 0.0
    %297 = vmatpush1.msra.mxu0 %v271
    %298 = vmatprep.subr.mxu0 0.0
    %299 = vmatpush1.msra.mxu0 %v272
    %300 = vmatprep.subr.mxu0 0.0
    %301 = vmatpush1.msra.mxu0 %v273
    %302 = vmatprep.subr.mxu0 0.0
    %303 = vmatpush1.msra.mxu0 %v274
    %304 = vmatprep.subr.mxu0 0.0
    %305 = vmatpush1.msra.mxu0 %v275
    %306 = vmatprep.subr.mxu0 0.0
    %307 = vmatpush1.msra.mxu0 %v276
    %308 = vmatprep.subr.mxu0 0.0
    %309 = vmatpush1.msra.mxu0 %v277
    %310 = vmatprep.subr.mxu0 0.0
    %311 = vmatpush1.msra.mxu0 %v278
    %312 = vmatprep.subr.mxu0 0.0
    %313 = vmatpush1.msra.mxu0 %v279
    %314 = vmatprep.subr.mxu0 0.0
    %315 = vmatpush1.msra.mxu0 %v280
    %316 = vmatprep.subr.mxu0 0.0
    %317 = vmatpush1.msra.mxu0 %v281
    %318 = vmatprep.subr.mxu0 0.0
    %319 = vmatpush1.msra.mxu0 %v282
    %320 = vmatprep.subr.mxu0 0.0
    %321 = vmatpush1.msra.mxu0 %v283
    %322 = vmatprep.subr.mxu0 0.0
    %323 = vmatpush1.msra.mxu0 %v284
    %324 = vmatprep.subr.mxu0 0.0
    %325 = vmatpush1.msra.mxu0 0.0
    %326 = vmatprep.subr.mxu0 0.0
    %327 = vmatpush1.msra.mxu0 0.0
    %328 = vmatprep.subr.mxu0 0.0
    %329 = vmatpush1.msra.mxu0 0.0
    %330 = vmatprep.subr.mxu0 0.0
    %331 = vmatpush1.msra.mxu0 0.0
    %332 = vmatprep.subr.mxu0 0.0
    %333 = vmatpush1.msra.mxu0 0.0
    %334 = vmatprep.subr.mxu0 0.0
    %335 = vmatpush1.msra.mxu0 0.0
    %336 = vmatprep.subr.mxu0 0.0
    %337 = vmatpush1.msra.mxu0 0.0
    %338 = vmatprep.subr.mxu0 0.0
    %339 = vmatpush1.msra.mxu0 0.0
    %340 = vmatprep.subr.mxu0 0.0
    %341 = vmatpush1.msra.mxu0 0.0
    %342 = vmatprep.subr.mxu0 0.0
    %343 = vmatpush1.msra.mxu0 0.0
    %344 = vmatprep.subr.mxu0 0.0
    %345 = vmatpush1.msra.mxu0 0.0
    %346 = vmatprep.subr.mxu0 0.0
    %347 = vmatpush1.msra.mxu0 0.0
    %348 = vmatprep.subr.mxu0 0.0
    %349 = vmatpush1.msra.mxu0 0.0
    %350 = vmatprep.subr.mxu0 0.0
    %351 = vmatpush1.msra.mxu0 0.0
    %352 = vmatprep.subr.mxu0 0.0
    %353 = vmatpush1.msra.mxu0 0.0
    %354 = vmatprep.subr.mxu0 0.0
    %355 = vmatpush1.msra.mxu0 0.0
    %356 = vmatprep.mubr.f32.mxu0 0.0
    %357 = vmatmul.mubr.f32.gmra.mrb[0].mxu0 %v268
    %v358 = vpop.f32.mrb[0].mxu0
    %v359 = vadd.f32 %v290, %v358
    %v360 = vpop.f32.mrb[0].mxu0
    %361 = vdwg.mxu0
    %362 = vst [vmem:[#allocation10] sm:$0xff] %v359
    // Predicated region
    $region46: #{tpu_custom_call.1} parent=1 // pred_check
      _
    $region47: #{tpu_custom_call.1} parent=1 // pred_check_branch
      %364 = sbr.rel (0) target = $region49
    $region48: #{tpu_custom_call.1} parent=1 // pred_region
      %s366 = ssub.s32 128, 128
      %367 = vsyncadd [#allocation4], %s366
      %s369 = sshll.u32 [#allocation10], 4
      %s370 = int_to_ptr.vmem [resolvable:$true] %s369
      %372 = dma.vmem_to_hbm [thread:$0]  %s370, 128, %s7, [#allocation4]
    $region49: #{tpu_custom_call.1} parent=1 // pred_fallthru
      _
    // Predicated region
    $region50: #{tpu_custom_call.1} parent=1 // pred_check
      _
    $region51: #{tpu_custom_call.1} parent=1 // pred_check_branch
      %374 = sbr.rel (0) target = $region53
    $region52: #{tpu_custom_call.1} parent=1 // pred_region
      %375 = dma.done [#allocation4], 128
    $region53: #{tpu_custom_call.1} parent=1 // pred_fallthru
      _
    %376 = vsyncpa [#allocation3], 1
    %377 = vsyncpa [#allocation6], 1
    %378 = vsyncpa [#allocation9], 1
    %379 = vsyncpa [#allocation4], 1

</llo_original>
